<compile_context>
chip_gen: v6e
topology: v6e:2x2x1
jax: 0.10.0
libtpu: 0.0.40
codegen_flags: <defaults>
</compile_context>

<pallas_src>
import functools

import jax
import jax.numpy as jnp
from jax.experimental import pallas as pl
from jax.experimental.pallas import tpu as pltpu


_NEG = -1e30  # fill value for padded vocab lanes (never wins max, exp -> 0)


def _round_up(x, m):
    return (x + m - 1) // m * m


def bigram_kernel(n_valid, idx_ref, tgt_ref, emb_ref, logits_ref, losspart_ref):
    """One row-tile of the bigram forward pass.

    idx_ref, tgt_ref : (TILE_N, 1) int32
    emb_ref          : (V_pad, V_pad) f32  (resident across the grid)
    logits_ref       : (TILE_N, V_pad) f32 (lane-dense store)
    losspart_ref     : (8, 128) f32 -- per-tile partial sum of per-example
                       losses, broadcast over the block (wrapper reads [0, 0]).
    """
    i = pl.program_id(0)

    idx = idx_ref[...]                                    # (TILE_N, 1)
    tgt = tgt_ref[...]                                    # (TILE_N, 1)
    emb = emb_ref[...]                                    # (V_pad, V_pad)

    tile_n = idx.shape[0]
    v_pad = emb.shape[1]

    # Embedding gather as one-hot @ table on the MXU (0/1 selectors => exact).
    col = jax.lax.broadcasted_iota(jnp.int32, (tile_n, v_pad), 1)
    one_hot = (col == idx).astype(jnp.float32)            # (TILE_N, V_pad)
    logits = jnp.dot(one_hot, emb,
                     preferred_element_type=jnp.float32)  # (TILE_N, V_pad)
    logits_ref[...] = logits

    # Cross entropy (mean over valid rows is finished in the wrapper).
    # Padded lanes carry -1e30: never the max, exp underflows to exactly 0,
    # so no explicit lane mask is needed.
    m = jnp.max(logits, axis=-1, keepdims=True)                         # (TILE_N, 1)
    lse = m + jnp.log(jnp.sum(jnp.exp(logits - m), axis=-1, keepdims=True))
    picked = jnp.sum(jnp.where(col == tgt, logits, 0.0),
                     axis=-1, keepdims=True)                            # (TILE_N, 1)
    per_ex = lse - picked

    # Zero out padded rows (global row id >= n_valid).
    row = i * tile_n + jax.lax.broadcasted_iota(jnp.int32, (tile_n, 1), 0)
    per_ex = jnp.where(row < n_valid, per_ex, 0.0)

    partial = jnp.sum(per_ex)                                            # scalar
    losspart_ref[...] = jnp.zeros((8, 128), jnp.float32) + partial


def bigram_forward(index, targets, emb_table, *, tile_n=256):
    """index, targets: (B, T) int; emb_table: (V, V) f32.

    Returns (logits (B, T, V) f32, loss () f32 or None) -- same semantics as
    BigramLanguage.forward.
    """
    B, T = index.shape
    V = emb_table.shape[0]
    N = B * T

    v_pad = _round_up(V, 128)
    tile_n = min(tile_n, _round_up(N, 8))
    n_pad = _round_up(N, tile_n)
    num_tiles = n_pad // tile_n

    # Pad the table: real entries in [:V, :V], everything else -1e30.
    emb_padded = jnp.full((v_pad, v_pad), _NEG, dtype=jnp.float32)
    emb_padded = emb_padded.at[:V, :V].set(emb_table.astype(jnp.float32))

    tgt_src = targets if targets is not None else jnp.zeros((B, T), jnp.int32)

    idx_flat = jnp.zeros((n_pad, 1), jnp.int32).at[:N, 0].set(
        index.reshape(N).astype(jnp.int32))
    tgt_flat = jnp.zeros((n_pad, 1), jnp.int32).at[:N, 0].set(
        tgt_src.reshape(N).astype(jnp.int32))

    cost = pl.CostEstimate(
        flops=2 * n_pad * v_pad * v_pad + 6 * n_pad * v_pad,
        transcendentals=n_pad * v_pad + n_pad,
        bytes_accessed=4 * (v_pad * v_pad + n_pad * v_pad + 2 * n_pad
                            + num_tiles * 8 * 128),
    )

    logits_pad, loss_parts = pl.pallas_call(
        functools.partial(bigram_kernel, N),
        out_shape=(
            jax.ShapeDtypeStruct((n_pad, v_pad), jnp.float32),
            jax.ShapeDtypeStruct((num_tiles * 8, 128), jnp.float32),
        ),
        grid=(num_tiles,),
        in_specs=[
            pl.BlockSpec((tile_n, 1), lambda i: (i, 0)),       # idx rows
            pl.BlockSpec((tile_n, 1), lambda i: (i, 0)),       # tgt rows
            pl.BlockSpec((v_pad, v_pad), lambda i: (0, 0)),    # table, resident
        ],
        out_specs=(
            pl.BlockSpec((tile_n, v_pad), lambda i: (i, 0)),   # logits rows
            pl.BlockSpec((8, 128), lambda i: (i, 0)),          # per-tile loss
        ),
        compiler_params=pltpu.CompilerParams(
            dimension_semantics=("parallel",),
            vmem_limit_bytes=32 * 1024 * 1024,
        ),
        cost_estimate=cost,
    )(idx_flat, tgt_flat, emb_padded)

    logits = logits_pad[:N, :V].reshape(B, T, V)
    if targets is None:
        return logits, None
    loss = jnp.sum(loss_parts.reshape(num_tiles, 8, 128)[:, 0, 0]) / float(N)
    return logits, loss

    # TODO(synk): generate() (autoregressive torch.multinomial sampling loop)
    # is host-side control flow and is not implemented as a kernel.


def _reference(index, targets, emb_table):
    B, T = index.shape
    V = emb_table.shape[0]
    ref_logits = emb_table[index]                                   # (B, T, V)
    flat = ref_logits.reshape(B * T, V)
    tflat = targets.reshape(B * T)
    ref_lse = jax.nn.logsumexp(flat, axis=-1)
    ref_loss = jnp.mean(ref_lse - flat[jnp.arange(B * T), tflat])
    return ref_logits, ref_loss


if __name__ == "__main__":
    vocab_size = 65          # e.g. tiny-shakespeare character vocab
    key = jax.random.PRNGKey(0)
    k_emb, k_idx, k_tgt, k_idx2, k_tgt2 = jax.random.split(key, 5)

    # nn.Embedding default init: N(0, 1).
    emb_table = jax.random.normal(k_emb, (vocab_size, vocab_size),
                                  dtype=jnp.float32)

    # --- small case (single tile) -------------------------------------------
    B, T = 2, 8
    index = jax.random.randint(k_idx, (B, T), 0, vocab_size, dtype=jnp.int32)
    targets = jax.random.randint(k_tgt, (B, T), 0, vocab_size, dtype=jnp.int32)

    logits, loss = bigram_forward(index, targets, emb_table)
    jax.block_until_ready((logits, loss))

    ref_logits, ref_loss = _reference(index, targets, emb_table)
    assert logits.shape == (B, T, vocab_size)
    assert jnp.allclose(logits, ref_logits, atol=1e-5, rtol=1e-5)
    assert jnp.allclose(loss, ref_loss, atol=1e-5, rtol=1e-5)

    # --- larger case (multiple tiles + padded rows) --------------------------
    B2, T2 = 4, 100
    index2 = jax.random.randint(k_idx2, (B2, T2), 0, vocab_size, dtype=jnp.int32)
    targets2 = jax.random.randint(k_tgt2, (B2, T2), 0, vocab_size, dtype=jnp.int32)

    logits2, loss2 = bigram_forward(index2, targets2, emb_table)
    jax.block_until_ready((logits2, loss2))

    ref_logits2, ref_loss2 = _reference(index2, targets2, emb_table)
    assert logits2.shape == (B2, T2, vocab_size)
    assert jnp.allclose(logits2, ref_logits2, atol=1e-5, rtol=1e-5)
    assert jnp.allclose(loss2, ref_loss2, atol=1e-4, rtol=1e-4)

    print("KERNEL_OK")
</pallas_src>

<mosaic_0001>
module attributes {stable_mosaic.version = 11 : i64} {
  func.func @bigram_kernel(%arg0: i32, %arg1: memref<16x1xi32, #tpu.memory_space<vmem>>, %arg2: memref<16x1xi32, #tpu.memory_space<vmem>>, %arg3: memref<128x128xf32, #tpu.memory_space<vmem>>, %arg4: memref<16x128xf32, #tpu.memory_space<vmem>>, %arg5: memref<8x128xf32, #tpu.memory_space<vmem>>) attributes {dimension_semantics = [#tpu.dimension_semantics<parallel>], iteration_bounds = array<i64: 1>, scalar_prefetch = 0 : i64, scratch_operands = 0 : i64, tpu.core_type = #tpu.core_type<tc>, window_params = [{transform_indices = @transform_0, window_bounds = array<i64: 16, 1>}, {transform_indices = @transform_1, window_bounds = array<i64: 16, 1>}, {pipeline_mode = #tpu.pipeline_mode<synchronous>, transform_indices = @transform_2, window_bounds = array<i64: 128, 128>}, {transform_indices = @transform_3, window_bounds = array<i64: 16, 128>}, {transform_indices = @transform_4, window_bounds = array<i64: 8, 128>}]} {
    %c0 = arith.constant 0 : index
    %c0_0 = arith.constant 0 : index
    %0 = vector.load %arg1[%c0, %c0_0] : memref<16x1xi32, #tpu.memory_space<vmem>>, vector<16x1xi32>
    %c0_1 = arith.constant 0 : index
    %c0_2 = arith.constant 0 : index
    %1 = vector.load %arg2[%c0_1, %c0_2] : memref<16x1xi32, #tpu.memory_space<vmem>>, vector<16x1xi32>
    %c0_3 = arith.constant 0 : index
    %c0_4 = arith.constant 0 : index
    %2 = vector.load %arg3[%c0_3, %c0_4] : memref<128x128xf32, #tpu.memory_space<vmem>>, vector<128x128xf32>
    %3 = tpu.iota {dimensions = array<i32: 1>} : vector<16x128xi32>
    %4 = vector.broadcast %0 : vector<16x1xi32> to vector<16x128xi32>
    %5 = arith.cmpi eq, %3, %4 : vector<16x128xi32>
    %6 = arith.extui %5 : vector<16x128xi1> to vector<16x128xi32>
    %7 = arith.sitofp %6 : vector<16x128xi32> to vector<16x128xf32>
    %cst = arith.constant dense<0.000000e+00> : vector<16x128xf32>
    %8 = tpu.matmul %7, %2, %cst {dimension_numbers = #tpu.dot_dimension_numbers<[1], [0], [0], [1], [0, 0, 1, 1], [], []>} : vector<16x128xf32>, vector<128x128xf32>, vector<16x128xf32> -> vector<16x128xf32>
    %c0_5 = arith.constant 0 : index
    %c0_6 = arith.constant 0 : index
    %9 = vector.load %arg4[%c0_5, %c0_6] : memref<16x128xf32, #tpu.memory_space<vmem>>, vector<16x128xf32>
    tpu.vector_store %arg4[%c0_5, %c0_6], %8 {strides = array<i32>} : memref<16x128xf32, #tpu.memory_space<vmem>>, vector<16x128xf32>,
    %cst_7 = arith.constant dense<0xFF800000> : vector<16xf32>
    %10 = vector.multi_reduction <maximumf>, %8, %cst_7 [1] : vector<16x128xf32> to vector<16xf32>
    %11 = vector.shape_cast %10 : vector<16xf32> to vector<16x1xf32>
    %12 = vector.broadcast %11 : vector<16x1xf32> to vector<16x128xf32>
    %13 = arith.subf %8, %12 : vector<16x128xf32>
    %14 = math.exp %13 : vector<16x128xf32>
    %cst_8 = arith.constant dense<0.000000e+00> : vector<16xf32>
    %15 = vector.multi_reduction <add>, %14, %cst_8 [1] : vector<16x128xf32> to vector<16xf32>
    %16 = vector.shape_cast %15 : vector<16xf32> to vector<16x1xf32>
    %17 = math.log %16 : vector<16x1xf32>
    %18 = arith.addf %11, %17 : vector<16x1xf32>
    %19 = vector.broadcast %1 : vector<16x1xi32> to vector<16x128xi32>
    %20 = arith.cmpi eq, %3, %19 : vector<16x128xi32>
    %cst_9 = arith.constant 0.000000e+00 : f32
    %21 = vector.broadcast %cst_9 : f32 to vector<16x128xf32>
    %22 = arith.select %20, %8, %21 : vector<16x128xi1>, vector<16x128xf32>
    %cst_10 = arith.constant dense<0.000000e+00> : vector<16xf32>
    %23 = vector.multi_reduction <add>, %22, %cst_10 [1] : vector<16x128xf32> to vector<16xf32>
    %24 = vector.shape_cast %23 : vector<16xf32> to vector<16x1xf32>
    %25 = arith.subf %18, %24 : vector<16x1xf32>
    %c16_i32 = arith.constant 16 : i32
    %26 = arith.muli %arg0, %c16_i32 : i32
    %27 = tpu.iota {dimensions = array<i32: 0>} : vector<16x1xi32>
    %28 = vector.broadcast %26 : i32 to vector<16x1xi32>
    %29 = arith.addi %28, %27 : vector<16x1xi32>
    %c16_i32_11 = arith.constant 16 : i32
    %30 = vector.broadcast %c16_i32_11 : i32 to vector<16x1xi32>
    %31 = arith.cmpi slt, %29, %30 : vector<16x1xi32>
    %cst_12 = arith.constant 0.000000e+00 : f32
    %32 = vector.broadcast %cst_12 : f32 to vector<16x1xf32>
    %33 = arith.select %31, %25, %32 : vector<16x1xi1>, vector<16x1xf32>
    %34 = vector.shape_cast %33 : vector<16x1xf32> to vector<1x16x1xf32>
    %cst_13 = arith.constant dense<0.000000e+00> : vector<1xf32>
    %35 = vector.multi_reduction <add>, %34, %cst_13 [1, 2] : vector<1x16x1xf32> to vector<1xf32>
    %36 = vector.shape_cast %35 : vector<1xf32> to vector<1x1x1xf32>
    %37 = vector.extract %36[0, 0, 0] : f32 from vector<1x1x1xf32>
    %cst_14 = arith.constant 0.000000e+00 : f32
    %38 = vector.broadcast %cst_14 : f32 to vector<8x128xf32>
    %39 = vector.broadcast %37 : f32 to vector<8x128xf32>
    %40 = arith.addf %38, %39 : vector<8x128xf32>
    %c0_15 = arith.constant 0 : index
    %c0_16 = arith.constant 0 : index
    %41 = vector.load %arg5[%c0_15, %c0_16] : memref<8x128xf32, #tpu.memory_space<vmem>>, vector<8x128xf32>
    tpu.vector_store %arg5[%c0_15, %c0_16], %40 {strides = array<i32>} : memref<8x128xf32, #tpu.memory_space<vmem>>, vector<8x128xf32>,
    return
  }
  func.func @transform_0(%arg0: i32) -> (i32, i32) {
    %c0_i32 = arith.constant 0 : i32
    %c0_i32_0 = arith.constant 0 : i32
    return %arg0, %c0_i32 : i32, i32
  }
  func.func @transform_1(%arg0: i32) -> (i32, i32) {
    %c0_i32 = arith.constant 0 : i32
    %c0_i32_0 = arith.constant 0 : i32
    return %arg0, %c0_i32 : i32, i32
  }
  func.func @transform_2(%arg0: i32) -> (i32, i32) {
    %c0_i32 = arith.constant 0 : i32
    %c0_i32_0 = arith.constant 0 : i32
    %c0_i32_1 = arith.constant 0 : i32
    return %c0_i32, %c0_i32_0 : i32, i32
  }
  func.func @transform_3(%arg0: i32) -> (i32, i32) {
    %c0_i32 = arith.constant 0 : i32
    %c0_i32_0 = arith.constant 0 : i32
    return %arg0, %c0_i32 : i32, i32
  }
  func.func @transform_4(%arg0: i32) -> (i32, i32) {
    %c0_i32 = arith.constant 0 : i32
    %c0_i32_0 = arith.constant 0 : i32
    return %arg0, %c0_i32 : i32, i32
  }
}

</mosaic_0001>

<llo_original>
// kernel: tpu_custom_call.1
$region0: #{tpu_custom_call.1}
  #allocation0 [shape = 'u32[]', space=smem, size = 0x4, offset = 0x4, fixed_abs, tag = 'smem constant byte address 0x4 - core index']
  #allocation1 [shape = 'u32[144,128]{1,0:T(1,128)}', space=vmem, size = 0x12000, scoped, tag = 'internal scratch']
  %s0 = inlined_call_operand.vmem [shape: s32[16,1], index: 0, kind: input, shape index: {}]
  %s1 = inlined_call_operand.vmem [shape: s32[16,1], index: 1, kind: input, shape index: {}]
  %s2 = inlined_call_operand.hbm [shape: f32[128,128], index: 2, kind: input, shape index: {}]
  %s3 = inlined_call_operand.hbm [shape: f32[16,128], index: 3, kind: output, shape index: {0}]
  %s4 = inlined_call_operand.hbm [shape: f32[8,128], index: 4, kind: output, shape index: {1}]
  %5 = xla_tuple %s3, %s4
  %s6 = sld [smem:[#allocation0]]
  $region34: #{tpu_custom_call.1} parent=0
    _
  %s8 = ssub.s32 1, %s6
  %s9 = scalar_select 0, %s8, %s6
  $region1: #{tpu_custom_call.1} parent=0
    #allocation2 [shape = 'u8[65536]{0}', space=vmem, size = 0x10000, scoped, tag = 'input window, operand 2, single buffered']
    #allocation3 [shape = 's32[1]{0}', space=sflag, size = 0x4, scoped, tag = 'scoped memory for tpu_custom_call.1']
    #allocation4 [shape = 's32[1]{0}', space=sflag, size = 0x4, scoped, tag = 'scoped memory for tpu_custom_call.1']
    #allocation5 [shape = 'u8[8192]{0}', space=vmem, size = 0x2000, scoped, tag = 'output window, operand 0, single buffered']
    #allocation6 [shape = 'u8[4096]{0}', space=vmem, size = 0x1000, scoped, tag = 'output window, operand 1, single buffered']
    #allocation7 [shape = 's32[1]{0}', space=sflag, size = 0x4, scoped, tag = 'scoped memory for tpu_custom_call.1']
    %10 = vsyncpa [#allocation3], 0
    %11 = vsyncpa [#allocation4], 0
    %12 = vsyncpa [#allocation7], 0
    // Predicated region
    $region2: #{tpu_custom_call.1} parent=1 // pred_check
      _
    $region3: #{tpu_custom_call.1} parent=1 // pred_check_branch
      %14 = sbr.rel (0) target = $region5
    $region4: #{tpu_custom_call.1} parent=1 // pred_region
      _
    $region5: #{tpu_custom_call.1} parent=1 // pred_fallthru
      _
    // Predicated region
    $region6: #{tpu_custom_call.1} parent=1 // pred_check
      _
    $region7: #{tpu_custom_call.1} parent=1 // pred_check_branch
      %16 = sbr.rel (0) target = $region9
    $region8: #{tpu_custom_call.1} parent=1 // pred_region
      _
    $region9: #{tpu_custom_call.1} parent=1 // pred_fallthru
      _
    // Predicated region
    $region10: #{tpu_custom_call.1} parent=1 // pred_check
      _
    $region11: #{tpu_custom_call.1} parent=1 // pred_check_branch
      %18 = sbr.rel (0) target = $region13
    $region12: #{tpu_custom_call.1} parent=1 // pred_region
      %s20 = ssub.s32 2048, 2048
      %21 = vsyncadd [#allocation3], %s20
      %s22 = sshll.u32 [#allocation2], 4
      %s23 = int_to_ptr.vmem [resolvable:$true] %s22
      %28 = dma.hbm_to_vmem [thread:$0]  %s2, 2048, %s23, [#allocation3], 128, 128, 8
    $region13: #{tpu_custom_call.1} parent=1 // pred_fallthru
      _
    // Predicated region
    $region14: #{tpu_custom_call.1} parent=1 // pred_check
      _
    $region15: #{tpu_custom_call.1} parent=1 // pred_check_branch
      %30 = sbr.rel (0) target = $region17
    $region16: #{tpu_custom_call.1} parent=1 // pred_region
      %31 = dma.done [#allocation3], 2048
    $region17: #{tpu_custom_call.1} parent=1 // pred_fallthru
      _
    %v32 = vld [vmem:[%s0] sm:$0xff]
    %v33 = vld [vmem:[%s0 + $0x8] sm:$0xff]
    %v34 = vld [vmem:[%s1] sm:$0xff]
    %v35 = vld [vmem:[%s1 + $0x8] sm:$0xff]
    %v36 = vld [vmem:[#allocation2] sm:$0xff]
    %v37 = vld [vmem:[#allocation2 + $0x8] sm:$0xff]
    %v38 = vld [vmem:[#allocation2 + $0x10] sm:$0xff]
    %v39 = vld [vmem:[#allocation2 + $0x18] sm:$0xff]
    %v40 = vld [vmem:[#allocation2 + $0x20] sm:$0xff]
    %v41 = vld [vmem:[#allocation2 + $0x28] sm:$0xff]
    %v42 = vld [vmem:[#allocation2 + $0x30] sm:$0xff]
    %v43 = vld [vmem:[#allocation2 + $0x38] sm:$0xff]
    %v44 = vld [vmem:[#allocation2 + $0x40] sm:$0xff]
    %v45 = vld [vmem:[#allocation2 + $0x48] sm:$0xff]
    %v46 = vld [vmem:[#allocation2 + $0x50] sm:$0xff]
    %v47 = vld [vmem:[#allocation2 + $0x58] sm:$0xff]
    %v48 = vld [vmem:[#allocation2 + $0x60] sm:$0xff]
    %v49 = vld [vmem:[#allocation2 + $0x68] sm:$0xff]
    %v50 = vld [vmem:[#allocation2 + $0x70] sm:$0xff]
    %v51 = vld [vmem:[#allocation2 + $0x78] sm:$0xff]
    %v52 = vlaneseq
    %v53 = vand.u32 %v52, 127
    %54 = vset.pattern.permute.xlu0 0
    %55 = vperm.xlu0 %54, %v32
    %v56 = vpop.permute.xlu0 %55
    %57 = vset.pattern.permute.xlu0 0
    %58 = vperm.xlu0 %57, %v33
    %v59 = vpop.permute.xlu0 %58
    %vm60 = vcmp.eq.s32.totalorder %v53, %v56
    %vm61 = vcmp.eq.s32.totalorder %v53, %v59
    %v62 = vsel %vm60, 1, 0
    %v63 = vsel %vm61, 1, 0
    %v64 = vcvt.s32.f32 %v62
    %v65 = vcvt.s32.f32 %v63
    %66 = vmatprep.subr.mxu0 0.0
    %67 = vmatpush1.msra.mxu0 %v51
    %68 = vmatprep.subr.mxu0 0.0
    %69 = vmatpush1.msra.mxu0 %v50
    %70 = vmatprep.subr.mxu0 0.0
    %71 = vmatpush1.msra.mxu0 %v49
    %72 = vmatprep.subr.mxu0 0.0
    %73 = vmatpush1.msra.mxu0 %v48
    %74 = vmatprep.subr.mxu0 0.0
    %75 = vmatpush1.msra.mxu0 %v47
    %76 = vmatprep.subr.mxu0 0.0
    %77 = vmatpush1.msra.mxu0 %v46
    %78 = vmatprep.subr.mxu0 0.0
    %79 = vmatpush1.msra.mxu0 %v45
    %80 = vmatprep.subr.mxu0 0.0
    %81 = vmatpush1.msra.mxu0 %v44
    %82 = vmatprep.subr.mxu0 0.0
    %83 = vmatpush1.msra.mxu0 %v43
    %84 = vmatprep.subr.mxu0 0.0
    %85 = vmatpush1.msra.mxu0 %v42
    %86 = vmatprep.subr.mxu0 0.0
    %87 = vmatpush1.msra.mxu0 %v41
    %88 = vmatprep.subr.mxu0 0.0
    %89 = vmatpush1.msra.mxu0 %v40
    %90 = vmatprep.subr.mxu0 0.0
    %91 = vmatpush1.msra.mxu0 %v39
    %92 = vmatprep.subr.mxu0 0.0
    %93 = vmatpush1.msra.mxu0 %v38
    %94 = vmatprep.subr.mxu0 0.0
    %95 = vmatpush1.msra.mxu0 %v37
    %96 = vmatprep.subr.mxu0 0.0
    %97 = vmatpush1.msra.mxu0 %v36
    %98 = vmatprep.subr.mxu0 0.0
    %99 = vmatpush2.msra.mxu0 0.0
    %100 = vmatprep.subr.mxu0 0.0
    %101 = vmatpush2.msra.mxu0 0.0
    %102 = vmatprep.subr.mxu0 0.0
    %103 = vmatpush2.msra.mxu0 0.0
    %104 = vmatprep.subr.mxu0 0.0
    %105 = vmatpush2.msra.mxu0 0.0
    %106 = vmatprep.subr.mxu0 0.0
    %107 = vmatpush2.msra.mxu0 0.0
    %108 = vmatprep.subr.mxu0 0.0
    %109 = vmatpush2.msra.mxu0 0.0
    %110 = vmatprep.subr.mxu0 0.0
    %111 = vmatpush2.msra.mxu0 0.0
    %112 = vmatprep.subr.mxu0 0.0
    %113 = vmatpush2.msra.mxu0 0.0
    %114 = vmatprep.subr.mxu0 0.0
    %115 = vmatpush2.msra.mxu0 0.0
    %116 = vmatprep.subr.mxu0 0.0
    %117 = vmatpush2.msra.mxu0 0.0
    %118 = vmatprep.subr.mxu0 0.0
    %119 = vmatpush2.msra.mxu0 0.0
    %120 = vmatprep.subr.mxu0 0.0
    %121 = vmatpush2.msra.mxu0 0.0
    %122 = vmatprep.subr.mxu0 0.0
    %123 = vmatpush2.msra.mxu0 0.0
    %124 = vmatprep.subr.mxu0 0.0
    %125 = vmatpush2.msra.mxu0 0.0
    %126 = vmatprep.subr.mxu0 0.0
    %127 = vmatpush2.msra.mxu0 0.0
    %128 = vmatprep.subr.mxu0 0.0
    %129 = vmatpush2.msra.mxu0 0.0
    %130 = vmatprep.mubr.f32.mxu0 0.0
    %131 = vmatmul.mubr.f32.gmra.mxu0 %v64
    %v132 = vpop.f32.mrf.mxu0
    %v133 = vadd.f32 0.0, %v132
    %v134 = vpop.f32.mrf.mxu0
    %135 = vmatprep.mubr.f32.mxu0 0.0
    %136 = vmatmul.mubr.f32.gmra.mxu0 %v65
    %v137 = vpop.f32.mrf.mxu0
    %v138 = vadd.f32 0.0, %v137
    %v139 = vpop.f32.mrf.mxu0
    %140 = vdwg.mxu0
    %141 = vst [vmem:[#allocation5] sm:$0xff] %v133
    %142 = vst [vmem:[#allocation5 + $0x8] sm:$0xff] %v138
    %143 = vmax.xlane.f32.xlu0 %v133
    %v144 = vpop.xlane.xlu0 %143
    %145 = vmax.xlane.f32.xlu0 %v138
    %v146 = vpop.xlane.xlu0 %145
    %v147 = vsub.f32 %v133, %v144
    %v148 = vsub.f32 %v138, %v146
    %v149 = vmul.f32 %v147, 1.442695
    %v150 = vpow.pop %v149
    %v151 = vmul.f32 %v148, 1.442695
    %v152 = vpow.pop %v151
    %153 = vadd.xlane.f32.xlu0 %v150
    %v154 = vpop.xlane.xlu0 %153
    %155 = vadd.xlane.f32.xlu0 %v152
    %v156 = vpop.xlane.xlu0 %155
    %v157 = vlog2.pop %v154
    %v158 = vmul.f32 %v157, 0.6931472
    %v159 = vlog2.pop %v156
    %v160 = vmul.f32 %v159, 0.6931472
    %v161 = vadd.f32 %v144, %v158
    %v162 = vadd.f32 %v146, %v160
    %163 = vset.pattern.permute.xlu0 0
    %164 = vperm.xlu0 %163, %v34
    %v165 = vpop.permute.xlu0 %164
    %166 = vset.pattern.permute.xlu0 0
    %167 = vperm.xlu0 %166, %v35
    %v168 = vpop.permute.xlu0 %167
    %vm169 = vcmp.eq.s32.totalorder %v53, %v165
    %vm170 = vcmp.eq.s32.totalorder %v53, %v168
    %v171 = vsel %vm169, %v133, 0.0
    %v172 = vsel %vm170, %v138, 0.0
    %173 = vadd.xlane.f32.xlu0 %v171
    %v174 = vpop.xlane.xlu0 %173
    %175 = vadd.xlane.f32.xlu0 %v172
    %v176 = vpop.xlane.xlu0 %175
    %v177 = vsub.f32 %v161, %v174
    %v178 = vsub.f32 %v162, %v176
    %s179 = smul.u32 0, 16
    %v180 = vlaneseq
    %v181 = vshrl.u32 %v180, 7
    %v182 = vadd.s32 %v181, 8
    %v183 = vstv %s179
    %v184 = vadd.s32 %v183, %v181
    %v185 = vadd.s32 %v183, %v182
    %vm186 = vcmp.lt.s32.totalorder %v184, 16
    %vm187 = vcmp.lt.s32.totalorder %v185, 16
    %v188 = vsel %vm186, %v177, 0.0
    %v189 = vsel %vm187, %v178, 0.0
    %vm190 = vcmask 7168
    %v191 = vsel %vm190, %v188, 0.0
    %v192 = vsel %vm190, %v189, 0.0
    %v193 = vadd.f32 %v191, %v192
    %194 = vadd.xlane.f32.xlu0 %v193
    %v195 = vpop.xlane.xlu0 %194
    %v196 = vrot.slane %v195, 4
    %v197 = vadd.f32 %v195, %v196
    %v198 = vrot.slane %v197, 2
    %v199 = vadd.f32 %v197, %v198
    %v200 = vrot.slane %v199, 1
    %v201 = vadd.f32 %v199, %v200
    %s202 = vtos %v201
    %v203 = vstv %s202
    %v204 = vadd.f32 %v203, 0.0
    %205 = vst [vmem:[#allocation6] sm:$0xff] %v204
    // Predicated region
    $region18: #{tpu_custom_call.1} parent=1 // pred_check
      _
    $region19: #{tpu_custom_call.1} parent=1 // pred_check_branch
      %207 = sbr.rel (0) target = $region21
    $region20: #{tpu_custom_call.1} parent=1 // pred_region
      %s209 = ssub.s32 256, 256
      %210 = vsyncadd [#allocation4], %s209
      %s211 = sshll.u32 [#allocation5], 4
      %s212 = int_to_ptr.vmem [resolvable:$true] %s211
      %217 = dma.vmem_to_hbm [thread:$0]  %s212, 256, %s3, [#allocation4], 128, 128, 8
    $region21: #{tpu_custom_call.1} parent=1 // pred_fallthru
      _
    // Predicated region
    $region22: #{tpu_custom_call.1} parent=1 // pred_check
      _
    $region23: #{tpu_custom_call.1} parent=1 // pred_check_branch
      %219 = sbr.rel (0) target = $region25
    $region24: #{tpu_custom_call.1} parent=1 // pred_region
      %s221 = ssub.s32 128, 128
      %222 = vsyncadd [#allocation7], %s221
      %s224 = sshll.u32 [#allocation6], 4
      %s225 = int_to_ptr.vmem [resolvable:$true] %s224
      %227 = dma.vmem_to_hbm [thread:$0]  %s225, 128, %s4, [#allocation7]
    $region25: #{tpu_custom_call.1} parent=1 // pred_fallthru
      _
    // Predicated region
    $region26: #{tpu_custom_call.1} parent=1 // pred_check
      _
    $region27: #{tpu_custom_call.1} parent=1 // pred_check_branch
      %229 = sbr.rel (0) target = $region29
    $region28: #{tpu_custom_call.1} parent=1 // pred_region
      %230 = dma.done [#allocation4], 256
    $region29: #{tpu_custom_call.1} parent=1 // pred_fallthru
      _
    // Predicated region
    $region30: #{tpu_custom_call.1} parent=1 // pred_check
      _
    $region31: #{tpu_custom_call.1} parent=1 // pred_check_branch
      %232 = sbr.rel (0) target = $region33
    $region32: #{tpu_custom_call.1} parent=1 // pred_region
      %233 = dma.done [#allocation7], 128
    $region33: #{tpu_custom_call.1} parent=1 // pred_fallthru
      _
    %234 = vsyncpa [#allocation3], 1
    %235 = vsyncpa [#allocation4], 1
    %236 = vsyncpa [#allocation7], 1

</llo_original>
